<compile_context>
chip_gen: v6e
topology: v6e:2x2x1
jax: 0.10.0
libtpu: 0.0.40
codegen_flags: <defaults>
</compile_context>

<pallas_src>
import functools

import jax
import jax.numpy as jnp
from jax.experimental import pallas as pl
from jax.experimental.pallas import tpu as pltpu


def _round_up(x, m):
    return ((x + m - 1) // m) * m


# ---------------------------------------------------------------------------
# Kernel
# ---------------------------------------------------------------------------
def _mlp2path_kernel(xc_ref, wa_ref, ba_ref, w2_ref, b2_ref, w3_ref, b3_ref,
                     out_ref, *, nc_pad):
    """One batch tile. xc = [x | xp] concatenated along features.

    wa/ba: fused block-diagonal first layer -> [m_padded(nc_pad) | h1(32)]
    w2/b2: premlp layer 2 (32 -> 32)
    w3/b3: premlp layer 3 padded to nc_pad output lanes
    out  : (TB, nc_pad) lane-dense block; padded columns are exact zeros.
    """
    xc = xc_ref[...]

    # Fused first stage: mlp Linear(x) and premlp Linear(xp) in one MXU pass.
    y = jnp.dot(xc, wa_ref[...], preferred_element_type=jnp.float32) + ba_ref[...]
    y = jnp.maximum(y, 0.0)
    m = y[:, :nc_pad]          # relu(x @ wm + bm), zero in padded lanes
    h = y[:, nc_pad:]          # relu(xp @ w1 + b1)

    # premlp layer 2
    h = jnp.dot(h, w2_ref[...], preferred_element_type=jnp.float32) + b2_ref[...]
    h = jnp.maximum(h, 0.0)

    # premlp layer 3 (columns padded to nc_pad -> padded lanes stay zero)
    p = jnp.dot(h, w3_ref[...], preferred_element_type=jnp.float32) + b3_ref[...]
    p = jnp.maximum(p, 0.0)

    out_ref[...] = (m + p).astype(out_ref.dtype)


# ---------------------------------------------------------------------------
# Wrapper
# ---------------------------------------------------------------------------
@functools.partial(jax.jit, static_argnames=("num_classes", "nc_pad", "batch_tile"))
def _mlp2path_forward_impl(xp, x, wa, ba, w2, b2, w3, b3, *,
                           num_classes, nc_pad, batch_tile):
    batch = x.shape[0]
    d_in = x.shape[1] + xp.shape[1]

    # Concatenate the two input paths once (feeds the fused first-stage matmul).
    xc = jnp.concatenate([x, xp], axis=1).astype(jnp.float32)

    # Batch tile: big (default 1024 rows) for HBM-roofline efficiency; shrink /
    # round to a multiple of 8 sublanes for small batches. Pad batch rows with
    # zeros (sliced off afterwards).
    tb = batch_tile
    if batch < tb:
        tb = _round_up(batch, 8)
    b_pad = _round_up(batch, tb)
    if b_pad != batch:
        xc = jnp.pad(xc, ((0, b_pad - batch), (0, 0)))

    grid = (b_pad // tb,)

    out = pl.pallas_call(
        functools.partial(_mlp2path_kernel, nc_pad=nc_pad),
        out_shape=jax.ShapeDtypeStruct((b_pad, nc_pad), jnp.float32),
        grid=grid,
        in_specs=[
            pl.BlockSpec((tb, d_in), lambda i: (i, 0)),          # activations: tiled
            pl.BlockSpec(wa.shape, lambda i: (0, 0)),            # weights: resident
            pl.BlockSpec(ba.shape, lambda i: (0, 0)),
            pl.BlockSpec(w2.shape, lambda i: (0, 0)),
            pl.BlockSpec(b2.shape, lambda i: (0, 0)),
            pl.BlockSpec(w3.shape, lambda i: (0, 0)),
            pl.BlockSpec(b3.shape, lambda i: (0, 0)),
        ],
        out_specs=pl.BlockSpec((tb, nc_pad), lambda i: (i, 0)),  # lane-dense output
        compiler_params=pltpu.CompilerParams(
            dimension_semantics=("parallel",),
        ),
    )(xc, wa, ba, w2, b2, w3, b3)

    return out[:batch, :num_classes]


def mlp2path_forward(xp, x, packed, *, batch_tile=1024):
    return _mlp2path_forward_impl(
        xp, x,
        packed["wa"], packed["ba"], packed["w2"], packed["b2"],
        packed["w3"], packed["b3"],
        num_classes=packed["num_classes"],
        nc_pad=packed["nc_pad"],
        batch_tile=batch_tile,
    )


# ---------------------------------------------------------------------------
# Parameter construction / packing
# ---------------------------------------------------------------------------
def _init_linear(key, in_dim, out_dim):
    """PyTorch nn.Linear default init, stored as (in, out) weight + (1, out) bias."""
    kw, kb = jax.random.split(key)
    bound = 1.0 / jnp.sqrt(jnp.float32(in_dim))
    w = jax.random.uniform(kw, (in_dim, out_dim), jnp.float32, -bound, bound)
    b = jax.random.uniform(kb, (1, out_dim), jnp.float32, -bound, bound)
    return w, b


def make_params(key, preinput_dims, input_dims, num_classes, prelayer_params=(32, 32)):
    h1, h2 = prelayer_params
    ks = jax.random.split(key, 4)
    wm, bm = _init_linear(ks[0], input_dims, num_classes)   # mlp: input -> classes
    w1, b1 = _init_linear(ks[1], preinput_dims, h1)         # premlp layer 1
    w2, b2 = _init_linear(ks[2], h1, h2)                    # premlp layer 2
    w3, b3 = _init_linear(ks[3], h2, num_classes)           # premlp layer 3
    return dict(wm=wm, bm=bm, w1=w1, b1=b1, w2=w2, b2=b2, w3=w3, b3=b3)


def pack_params(p):
    """Pack raw per-layer params into the fused / lane-padded layout the kernel uses."""
    input_dims, nc = p["wm"].shape
    preinput_dims, h1 = p["w1"].shape
    h2 = p["w2"].shape[1]
    nc_pad = max(128, _round_up(nc, 128))

    # Fused block-diagonal first-stage weight: [x | xp] @ [[wm, 0], [0, w1]]
    # with the mlp-path columns padded to a full 128-lane group.
    wa = jnp.zeros((input_dims + preinput_dims, nc_pad + h1), jnp.float32)
    wa = wa.at[:input_dims, :nc].set(p["wm"])
    wa = wa.at[input_dims:, nc_pad:].set(p["w1"])
    ba = jnp.zeros((1, nc_pad + h1), jnp.float32)
    ba = ba.at[:, :nc].set(p["bm"])
    ba = ba.at[:, nc_pad:].set(p["b1"])

    # Last premlp layer padded to nc_pad output lanes (padded cols -> exact zeros).
    w3 = jnp.zeros((h2, nc_pad), jnp.float32).at[:, :nc].set(p["w3"])
    b3 = jnp.zeros((1, nc_pad), jnp.float32).at[:, :nc].set(p["b3"])

    return dict(wa=wa, ba=ba, w2=p["w2"], b2=p["b2"], w3=w3, b3=b3,
                num_classes=nc, nc_pad=nc_pad)


def reference_forward(xp, x, p):
    """Pure-JAX reference (mirrors the PyTorch module)."""
    m = jnp.maximum(x @ p["wm"] + p["bm"], 0.0)
    h = jnp.maximum(xp @ p["w1"] + p["b1"], 0.0)
    h = jnp.maximum(h @ p["w2"] + p["b2"], 0.0)
    q = jnp.maximum(h @ p["w3"] + p["b3"], 0.0)
    return m + q


# ---------------------------------------------------------------------------
# Demo / correctness check
# ---------------------------------------------------------------------------
if __name__ == "__main__":
    preinput_dims = 8
    input_dims = 16
    num_classes = 4

    key = jax.random.PRNGKey(0)
    k_xp, k_x, k_p, k_xp2, k_x2 = jax.random.split(key, 5)
    params = make_params(k_p, preinput_dims, input_dims, num_classes)
    packed = pack_params(params)

    # Small-shape check (single grid step).
    batch = 8
    xp_in = jax.random.normal(k_xp, (batch, preinput_dims), jnp.float32)
    x_in = jax.random.normal(k_x, (batch, input_dims), jnp.float32)
    out = jax.block_until_ready(mlp2path_forward(xp_in, x_in, packed))
    ref = reference_forward(xp_in, x_in, params)
    assert out.shape == (batch, num_classes)
    assert jnp.allclose(out, ref, atol=1e-5, rtol=1e-5), "mismatch vs JAX reference (small batch)"

    # Multi-tile check (exercises the batch grid, padding and output slicing).
    batch2 = 1040
    xp2 = jax.random.normal(k_xp2, (batch2, preinput_dims), jnp.float32)
    x2 = jax.random.normal(k_x2, (batch2, input_dims), jnp.float32)
    out2 = jax.block_until_ready(mlp2path_forward(xp2, x2, packed, batch_tile=512))
    ref2 = reference_forward(xp2, x2, params)
    assert out2.shape == (batch2, num_classes)
    assert jnp.allclose(out2, ref2, atol=1e-5, rtol=1e-5), "mismatch vs JAX reference (tiled batch)"

    print("KERNEL_OK")
</pallas_src>

<mosaic_0001>
module attributes {stable_mosaic.version = 11 : i64} {
  func.func @_mlp2path_kernel(%arg0: i32, %arg1: memref<8x24xf32, #tpu.memory_space<vmem>>, %arg2: memref<24x160xf32, #tpu.memory_space<vmem>>, %arg3: memref<1x160xf32, #tpu.memory_space<vmem>>, %arg4: memref<32x32xf32, #tpu.memory_space<vmem>>, %arg5: memref<1x32xf32, #tpu.memory_space<vmem>>, %arg6: memref<32x128xf32, #tpu.memory_space<vmem>>, %arg7: memref<1x128xf32, #tpu.memory_space<vmem>>, %arg8: memref<8x128xf32, #tpu.memory_space<vmem>>) attributes {dimension_semantics = [#tpu.dimension_semantics<parallel>], iteration_bounds = array<i64: 1>, scalar_prefetch = 0 : i64, scratch_operands = 0 : i64, tpu.core_type = #tpu.core_type<tc>, window_params = [{transform_indices = @transform_0, window_bounds = array<i64: 8, 24>}, {pipeline_mode = #tpu.pipeline_mode<synchronous>, transform_indices = @transform_1, window_bounds = array<i64: 24, 160>}, {pipeline_mode = #tpu.pipeline_mode<synchronous>, transform_indices = @transform_2, window_bounds = array<i64: 1, 160>}, {pipeline_mode = #tpu.pipeline_mode<synchronous>, transform_indices = @transform_3, window_bounds = array<i64: 32, 32>}, {pipeline_mode = #tpu.pipeline_mode<synchronous>, transform_indices = @transform_4, window_bounds = array<i64: 1, 32>}, {pipeline_mode = #tpu.pipeline_mode<synchronous>, transform_indices = @transform_5, window_bounds = array<i64: 32, 128>}, {pipeline_mode = #tpu.pipeline_mode<synchronous>, transform_indices = @transform_6, window_bounds = array<i64: 1, 128>}, {transform_indices = @transform_7, window_bounds = array<i64: 8, 128>}]} {
    %c0 = arith.constant 0 : index
    %c0_0 = arith.constant 0 : index
    %0 = vector.load %arg1[%c0, %c0_0] : memref<8x24xf32, #tpu.memory_space<vmem>>, vector<8x24xf32>
    %c0_1 = arith.constant 0 : index
    %c0_2 = arith.constant 0 : index
    %1 = vector.load %arg2[%c0_1, %c0_2] : memref<24x160xf32, #tpu.memory_space<vmem>>, vector<24x160xf32>
    %cst = arith.constant dense<0.000000e+00> : vector<8x160xf32>
    %2 = tpu.matmul %0, %1, %cst {dimension_numbers = #tpu.dot_dimension_numbers<[1], [0], [0], [1], [0, 0, 1, 1], [], []>} : vector<8x24xf32>, vector<24x160xf32>, vector<8x160xf32> -> vector<8x160xf32>
    %c0_3 = arith.constant 0 : index
    %c0_4 = arith.constant 0 : index
    %3 = vector.load %arg3[%c0_3, %c0_4] : memref<1x160xf32, #tpu.memory_space<vmem>>, vector<1x160xf32>
    %4 = vector.broadcast %3 : vector<1x160xf32> to vector<8x160xf32>
    %5 = arith.addf %2, %4 : vector<8x160xf32>
    %cst_5 = arith.constant 0.000000e+00 : f32
    %6 = vector.broadcast %cst_5 : f32 to vector<8x160xf32>
    %7 = arith.maximumf %5, %6 : vector<8x160xf32>
    %8 = vector.extract_strided_slice %7 {offsets = [0, 0], sizes = [8, 128], strides = [1, 1]} : vector<8x160xf32> to vector<8x128xf32>
    %9 = vector.extract_strided_slice %7 {offsets = [0, 128], sizes = [8, 32], strides = [1, 1]} : vector<8x160xf32> to vector<8x32xf32>
    %c0_6 = arith.constant 0 : index
    %c0_7 = arith.constant 0 : index
    %10 = vector.load %arg4[%c0_6, %c0_7] : memref<32x32xf32, #tpu.memory_space<vmem>>, vector<32x32xf32>
    %cst_8 = arith.constant dense<0.000000e+00> : vector<8x32xf32>
    %11 = tpu.matmul %9, %10, %cst_8 {dimension_numbers = #tpu.dot_dimension_numbers<[1], [0], [0], [1], [0, 0, 1, 1], [], []>} : vector<8x32xf32>, vector<32x32xf32>, vector<8x32xf32> -> vector<8x32xf32>
    %c0_9 = arith.constant 0 : index
    %c0_10 = arith.constant 0 : index
    %12 = vector.load %arg5[%c0_9, %c0_10] : memref<1x32xf32, #tpu.memory_space<vmem>>, vector<1x32xf32>
    %13 = vector.broadcast %12 : vector<1x32xf32> to vector<8x32xf32>
    %14 = arith.addf %11, %13 : vector<8x32xf32>
    %cst_11 = arith.constant 0.000000e+00 : f32
    %15 = vector.broadcast %cst_11 : f32 to vector<8x32xf32>
    %16 = arith.maximumf %14, %15 : vector<8x32xf32>
    %c0_12 = arith.constant 0 : index
    %c0_13 = arith.constant 0 : index
    %17 = vector.load %arg6[%c0_12, %c0_13] : memref<32x128xf32, #tpu.memory_space<vmem>>, vector<32x128xf32>
    %cst_14 = arith.constant dense<0.000000e+00> : vector<8x128xf32>
    %18 = tpu.matmul %16, %17, %cst_14 {dimension_numbers = #tpu.dot_dimension_numbers<[1], [0], [0], [1], [0, 0, 1, 1], [], []>} : vector<8x32xf32>, vector<32x128xf32>, vector<8x128xf32> -> vector<8x128xf32>
    %c0_15 = arith.constant 0 : index
    %c0_16 = arith.constant 0 : index
    %19 = vector.load %arg7[%c0_15, %c0_16] : memref<1x128xf32, #tpu.memory_space<vmem>>, vector<1x128xf32>
    %20 = vector.broadcast %19 : vector<1x128xf32> to vector<8x128xf32>
    %21 = arith.addf %18, %20 : vector<8x128xf32>
    %cst_17 = arith.constant 0.000000e+00 : f32
    %22 = vector.broadcast %cst_17 : f32 to vector<8x128xf32>
    %23 = arith.maximumf %21, %22 : vector<8x128xf32>
    %24 = arith.addf %8, %23 : vector<8x128xf32>
    %c0_18 = arith.constant 0 : index
    %c0_19 = arith.constant 0 : index
    %25 = vector.load %arg8[%c0_18, %c0_19] : memref<8x128xf32, #tpu.memory_space<vmem>>, vector<8x128xf32>
    tpu.vector_store %arg8[%c0_18, %c0_19], %24 {strides = array<i32>} : memref<8x128xf32, #tpu.memory_space<vmem>>, vector<8x128xf32>,
    return
  }
  func.func @transform_0(%arg0: i32) -> (i32, i32) {
    %c0_i32 = arith.constant 0 : i32
    %c0_i32_0 = arith.constant 0 : i32
    return %arg0, %c0_i32 : i32, i32
  }
  func.func @transform_1(%arg0: i32) -> (i32, i32) {
    %c0_i32 = arith.constant 0 : i32
    %c0_i32_0 = arith.constant 0 : i32
    %c0_i32_1 = arith.constant 0 : i32
    return %c0_i32, %c0_i32_0 : i32, i32
  }
  func.func @transform_2(%arg0: i32) -> (i32, i32) {
    %c0_i32 = arith.constant 0 : i32
    %c0_i32_0 = arith.constant 0 : i32
    %c0_i32_1 = arith.constant 0 : i32
    return %c0_i32, %c0_i32_0 : i32, i32
  }
  func.func @transform_3(%arg0: i32) -> (i32, i32) {
    %c0_i32 = arith.constant 0 : i32
    %c0_i32_0 = arith.constant 0 : i32
    %c0_i32_1 = arith.constant 0 : i32
    return %c0_i32, %c0_i32_0 : i32, i32
  }
  func.func @transform_4(%arg0: i32) -> (i32, i32) {
    %c0_i32 = arith.constant 0 : i32
    %c0_i32_0 = arith.constant 0 : i32
    %c0_i32_1 = arith.constant 0 : i32
    return %c0_i32, %c0_i32_0 : i32, i32
  }
  func.func @transform_5(%arg0: i32) -> (i32, i32) {
    %c0_i32 = arith.constant 0 : i32
    %c0_i32_0 = arith.constant 0 : i32
    %c0_i32_1 = arith.constant 0 : i32
    return %c0_i32, %c0_i32_0 : i32, i32
  }
  func.func @transform_6(%arg0: i32) -> (i32, i32) {
    %c0_i32 = arith.constant 0 : i32
    %c0_i32_0 = arith.constant 0 : i32
    %c0_i32_1 = arith.constant 0 : i32
    return %c0_i32, %c0_i32_0 : i32, i32
  }
  func.func @transform_7(%arg0: i32) -> (i32, i32) {
    %c0_i32 = arith.constant 0 : i32
    %c0_i32_0 = arith.constant 0 : i32
    return %arg0, %c0_i32 : i32, i32
  }
}

</mosaic_0001>

<llo_original>
// kernel: _mlp2path_forward_impl.1
$region0: #{_mlp2path_forward_impl.1}
  #allocation0 [shape = 'u32[]', space=smem, size = 0x4, offset = 0x4, fixed_abs, tag = 'smem constant byte address 0x4 - core index']
  #allocation1 [shape = 'u32[144,128]{1,0:T(1,128)}', space=vmem, size = 0x12000, scoped, tag = 'internal scratch']
  %s0 = inlined_call_operand.vmem [shape: f32[8,24], index: 0, kind: input, shape index: {}]
  %s1 = inlined_call_operand.hbm [shape: f32[24,160], index: 1, kind: input, shape index: {}]
  %s2 = inlined_call_operand.vmem [shape: f32[1,160], index: 2, kind: input, shape index: {}]
  %s3 = inlined_call_operand.hbm [shape: f32[32,32], index: 3, kind: input, shape index: {}]
  %s4 = inlined_call_operand.hbm [shape: f32[1,32], index: 4, kind: input, shape index: {}]
  %s5 = inlined_call_operand.vmem [shape: f32[32,128], index: 5, kind: input, shape index: {}]
  %s6 = inlined_call_operand.vmem [shape: f32[1,128], index: 6, kind: input, shape index: {}]
  %s7 = inlined_call_operand.vmem [shape: f32[8,128], index: 7, kind: output, shape index: {}]
  %s8 = sld [smem:[#allocation0]]
  $region50: #{_mlp2path_forward_impl.1} parent=0
    _
  %s10 = ssub.s32 1, %s8
  %s11 = scalar_select 0, %s10, %s8
  $region1: #{_mlp2path_forward_impl.1} parent=0
    #allocation2 [shape = 'u8[24576]{0}', space=vmem, size = 0x6000, scoped, tag = 'input window, operand 1, single buffered']
    #allocation3 [shape = 's32[1]{0}', space=sflag, size = 0x4, scoped, tag = 'scoped memory for _mlp2path_forward_impl.1']
    #allocation4 [shape = 'u8[16384]{0}', space=vmem, size = 0x4000, scoped, tag = 'input window, operand 3, single buffered']
    #allocation5 [shape = 's32[1]{0}', space=sflag, size = 0x4, scoped, tag = 'scoped memory for _mlp2path_forward_impl.1']
    #allocation6 [shape = 'u8[512]{0}', space=vmem, size = 0x400, scoped, tag = 'input window, operand 4, single buffered']
    %12 = vsyncpa [#allocation3], 0
    %13 = vsyncpa [#allocation5], 0
    // Predicated region
    $region2: #{_mlp2path_forward_impl.1} parent=1 // pred_check
      _
    $region3: #{_mlp2path_forward_impl.1} parent=1 // pred_check_branch
      %15 = sbr.rel (0) target = $region5
    $region4: #{_mlp2path_forward_impl.1} parent=1 // pred_region
      _
    $region5: #{_mlp2path_forward_impl.1} parent=1 // pred_fallthru
      _
    // Predicated region
    $region6: #{_mlp2path_forward_impl.1} parent=1 // pred_check
      _
    $region7: #{_mlp2path_forward_impl.1} parent=1 // pred_check_branch
      %17 = sbr.rel (0) target = $region9
    $region8: #{_mlp2path_forward_impl.1} parent=1 // pred_region
      %s19 = ssub.s32 768, 768
      %20 = vsyncadd [#allocation3], %s19
      %s21 = sshll.u32 [#allocation2], 4
      %s22 = int_to_ptr.vmem [resolvable:$true] %s21
      %27 = dma.hbm_to_vmem [thread:$0]  %s1, 768, %s22, [#allocation3], 256, 256, 16
    $region9: #{_mlp2path_forward_impl.1} parent=1 // pred_fallthru
      _
    // Predicated region
    $region10: #{_mlp2path_forward_impl.1} parent=1 // pred_check
      _
    $region11: #{_mlp2path_forward_impl.1} parent=1 // pred_check_branch
      %29 = sbr.rel (0) target = $region13
    $region12: #{_mlp2path_forward_impl.1} parent=1 // pred_region
      _
    $region13: #{_mlp2path_forward_impl.1} parent=1 // pred_fallthru
      _
    // Predicated region
    $region14: #{_mlp2path_forward_impl.1} parent=1 // pred_check
      _
    $region15: #{_mlp2path_forward_impl.1} parent=1 // pred_check_branch
      %31 = sbr.rel (0) target = $region17
    $region16: #{_mlp2path_forward_impl.1} parent=1 // pred_region
      %s33 = ssub.s32 512, 512
      %34 = vsyncadd [#allocation5], %s33
      %s35 = sshll.u32 [#allocation4], 4
      %s36 = int_to_ptr.vmem [resolvable:$true] %s35
      %41 = dma.hbm_to_vmem [thread:$0]  %s3, 512, %s36, [#allocation5], 128, 128, 8
    $region17: #{_mlp2path_forward_impl.1} parent=1 // pred_fallthru
      _
    // Predicated region
    $region18: #{_mlp2path_forward_impl.1} parent=1 // pred_check
      _
    $region19: #{_mlp2path_forward_impl.1} parent=1 // pred_check_branch
      %43 = sbr.rel (0) target = $region21
    $region20: #{_mlp2path_forward_impl.1} parent=1 // pred_region
      %s45 = ssub.s32 16, 16
      %46 = vsyncadd [#allocation5], %s45
      %s48 = sshll.u32 [#allocation6], 4
      %s49 = int_to_ptr.vmem [resolvable:$true] %s48
      %51 = dma.hbm_to_vmem [thread:$0]  %s4, 16, %s49, [#allocation5]
    $region21: #{_mlp2path_forward_impl.1} parent=1 // pred_fallthru
      _
    // Predicated region
    $region22: #{_mlp2path_forward_impl.1} parent=1 // pred_check
      _
    $region23: #{_mlp2path_forward_impl.1} parent=1 // pred_check_branch
      %53 = sbr.rel (0) target = $region25
    $region24: #{_mlp2path_forward_impl.1} parent=1 // pred_region
      _
    $region25: #{_mlp2path_forward_impl.1} parent=1 // pred_fallthru
      _
    // Predicated region
    $region26: #{_mlp2path_forward_impl.1} parent=1 // pred_check
      _
    $region27: #{_mlp2path_forward_impl.1} parent=1 // pred_check_branch
      %55 = sbr.rel (0) target = $region29
    $region28: #{_mlp2path_forward_impl.1} parent=1 // pred_region
      _
    $region29: #{_mlp2path_forward_impl.1} parent=1 // pred_fallthru
      _
    // Predicated region
    $region30: #{_mlp2path_forward_impl.1} parent=1 // pred_check
      _
    $region31: #{_mlp2path_forward_impl.1} parent=1 // pred_check_branch
      %57 = sbr.rel (0) target = $region33
    $region32: #{_mlp2path_forward_impl.1} parent=1 // pred_region
      %58 = dma.done [#allocation3], 768
    $region33: #{_mlp2path_forward_impl.1} parent=1 // pred_fallthru
      _
    // Predicated region
    $region34: #{_mlp2path_forward_impl.1} parent=1 // pred_check
      _
    $region35: #{_mlp2path_forward_impl.1} parent=1 // pred_check_branch
      %60 = sbr.rel (0) target = $region37
    $region36: #{_mlp2path_forward_impl.1} parent=1 // pred_region
      %61 = dma.done [#allocation5], 512
    $region37: #{_mlp2path_forward_impl.1} parent=1 // pred_fallthru
      _
    // Predicated region
    $region38: #{_mlp2path_forward_impl.1} parent=1 // pred_check
      _
    $region39: #{_mlp2path_forward_impl.1} parent=1 // pred_check_branch
      %63 = sbr.rel (0) target = $region41
    $region40: #{_mlp2path_forward_impl.1} parent=1 // pred_region
      %64 = dma.done [#allocation5], 16
    $region41: #{_mlp2path_forward_impl.1} parent=1 // pred_fallthru
      _
    %v65 = vld [vmem:[%s0] sm:$0xff]
    %v66 = vld [vmem:[#allocation2] sm:$0xff]
    %v67 = vld [vmem:[#allocation2 + $0x8] sm:$0xff]
    %v68 = vld [vmem:[#allocation2 + $0x10] sm:$0xff]
    %v69 = vld [vmem:[#allocation2 + $0x18] sm:$0xff]
    %v70 = vld [vmem:[#allocation2 + $0x20] sm:$0xff]
    %v71 = vld [vmem:[#allocation2 + $0x28] sm:$0xff]
    %v72 = vld [vmem:[%s2] sm:$0x3]
    %v74 = vlaneseq
    %v75 = vshrl.u32 %v74, 7
    %v76 = vsub.s32 0, %v75
    %v77 = vrot.slane %v72, %v76
    %v78 = vlaneseq
    %v79 = vshrl.u32 %v78, 7
    %v80 = vsub.s32 1, %v79
    %v81 = vrot.slane %v72, %v80
    %vm84 = vcmask 195584
    %v86 = vsel %vm84, %v65, 0
    %88 = vmatprep.subr.mxu0 0.0
    %89 = vmatpush1.msra.mxu0 0.0
    %90 = vmatprep.subr.mxu0 0.0
    %91 = vmatpush1.msra.mxu0 0.0
    %92 = vmatprep.subr.mxu0 0.0
    %93 = vmatpush1.msra.mxu0 0.0
    %94 = vmatprep.subr.mxu0 0.0
    %95 = vmatpush1.msra.mxu0 0.0
    %96 = vmatprep.subr.mxu0 0.0
    %97 = vmatpush1.msra.mxu0 0.0
    %98 = vmatprep.subr.mxu0 0.0
    %99 = vmatpush1.msra.mxu0 0.0
    %100 = vmatprep.subr.mxu0 0.0
    %101 = vmatpush1.msra.mxu0 0.0
    %102 = vmatprep.subr.mxu0 0.0
    %103 = vmatpush1.msra.mxu0 0.0
    %104 = vmatprep.subr.mxu0 0.0
    %105 = vmatpush1.msra.mxu0 0.0
    %106 = vmatprep.subr.mxu0 0.0
    %107 = vmatpush1.msra.mxu0 0.0
    %108 = vmatprep.subr.mxu0 0.0
    %109 = vmatpush1.msra.mxu0 0.0
    %110 = vmatprep.subr.mxu0 0.0
    %111 = vmatpush1.msra.mxu0 0.0
    %112 = vmatprep.subr.mxu0 0.0
    %113 = vmatpush1.msra.mxu0 0.0
    %114 = vmatprep.subr.mxu0 %v71
    %115 = vmatpush1.msra.mxu0 %v70
    %116 = vmatprep.subr.mxu0 %v69
    %117 = vmatpush1.msra.mxu0 %v68
    %118 = vmatprep.subr.mxu0 %v67
    %119 = vmatpush1.msra.mxu0 %v66
    %120 = vmatprep.subr.mxu0 0.0
    %121 = vmatpush2.msra.mxu0 0.0
    %122 = vmatprep.subr.mxu0 0.0
    %123 = vmatpush2.msra.mxu0 0.0
    %124 = vmatprep.subr.mxu0 0.0
    %125 = vmatpush2.msra.mxu0 0.0
    %126 = vmatprep.subr.mxu0 0.0
    %127 = vmatpush2.msra.mxu0 0.0
    %128 = vmatprep.subr.mxu0 0.0
    %129 = vmatpush2.msra.mxu0 0.0
    %130 = vmatprep.subr.mxu0 0.0
    %131 = vmatpush2.msra.mxu0 0.0
    %132 = vmatprep.subr.mxu0 0.0
    %133 = vmatpush2.msra.mxu0 0.0
    %134 = vmatprep.subr.mxu0 0.0
    %135 = vmatpush2.msra.mxu0 0.0
    %136 = vmatprep.subr.mxu0 0.0
    %137 = vmatpush2.msra.mxu0 0.0
    %138 = vmatprep.subr.mxu0 0.0
    %139 = vmatpush2.msra.mxu0 0.0
    %140 = vmatprep.subr.mxu0 0.0
    %141 = vmatpush2.msra.mxu0 0.0
    %142 = vmatprep.subr.mxu0 0.0
    %143 = vmatpush2.msra.mxu0 0.0
    %144 = vmatprep.subr.mxu0 0.0
    %145 = vmatpush2.msra.mxu0 0.0
    %146 = vmatprep.subr.mxu0 0.0
    %147 = vmatpush2.msra.mxu0 0.0
    %148 = vmatprep.subr.mxu0 0.0
    %149 = vmatpush2.msra.mxu0 0.0
    %150 = vmatprep.subr.mxu0 0.0
    %151 = vmatpush2.msra.mxu0 0.0
    %152 = vmatprep.mubr.f32.mxu0 0.0
    %153 = vmatmul.mubr.f32.gmra.mxu0 %v86
    %v154 = vpop.f32.mrf.mxu0
    %v155 = vadd.f32 %v77, %v154
    %v156 = vpop.f32.mrf.mxu0
    %v157 = vadd.f32 %v81, %v156
    %158 = vdwg.mxu0
    %v159 = vmax.f32 %v155, 0.0
    %v160 = vmax.f32 %v157, 0.0
    %v161 = vld [vmem:[#allocation4] sm:$0xff]
    %v162 = vld [vmem:[#allocation4 + $0x8] sm:$0xff]
    %v163 = vld [vmem:[#allocation4 + $0x10] sm:$0xff]
    %v164 = vld [vmem:[#allocation4 + $0x18] sm:$0xff]
    %v165 = vld [vmem:[#allocation6] sm:$0x1]
    %v167 = vlaneseq
    %v168 = vshrl.u32 %v167, 7
    %v169 = vsub.s32 0, %v168
    %v170 = vrot.slane %v165, %v169
    %vm172 = vcmask 261120
    %v174 = vsel %vm172, %v160, 0
    %176 = vmatprep.subr.mxu0 0.0
    %177 = vmatpush1.msra.mxu0 0.0
    %178 = vmatprep.subr.mxu0 0.0
    %179 = vmatpush1.msra.mxu0 0.0
    %180 = vmatprep.subr.mxu0 0.0
    %181 = vmatpush1.msra.mxu0 0.0
    %182 = vmatprep.subr.mxu0 0.0
    %183 = vmatpush1.msra.mxu0 0.0
    %184 = vmatprep.subr.mxu0 0.0
    %185 = vmatpush1.msra.mxu0 0.0
    %186 = vmatprep.subr.mxu0 0.0
    %187 = vmatpush1.msra.mxu0 0.0
    %188 = vmatprep.subr.mxu0 0.0
    %189 = vmatpush1.msra.mxu0 0.0
    %190 = vmatprep.subr.mxu0 0.0
    %191 = vmatpush1.msra.mxu0 0.0
    %192 = vmatprep.subr.mxu0 0.0
    %193 = vmatpush1.msra.mxu0 0.0
    %194 = vmatprep.subr.mxu0 0.0
    %195 = vmatpush1.msra.mxu0 0.0
    %196 = vmatprep.subr.mxu0 0.0
    %197 = vmatpush1.msra.mxu0 0.0
    %198 = vmatprep.subr.mxu0 0.0
    %199 = vmatpush1.msra.mxu0 0.0
    %200 = vmatprep.subr.mxu0 0.0
    %201 = vmatpush1.msra.mxu0 %v164
    %202 = vmatprep.subr.mxu0 0.0
    %203 = vmatpush1.msra.mxu0 %v163
    %204 = vmatprep.subr.mxu0 0.0
    %205 = vmatpush1.msra.mxu0 %v162
    %206 = vmatprep.subr.mxu0 0.0
    %207 = vmatpush1.msra.mxu0 %v161
    %208 = vmatprep.subr.mxu0 0.0
    %209 = vmatpush2.msra.mxu0 0.0
    %210 = vmatprep.subr.mxu0 0.0
    %211 = vmatpush2.msra.mxu0 0.0
    %212 = vmatprep.subr.mxu0 0.0
    %213 = vmatpush2.msra.mxu0 0.0
    %214 = vmatprep.subr.mxu0 0.0
    %215 = vmatpush2.msra.mxu0 0.0
    %216 = vmatprep.subr.mxu0 0.0
    %217 = vmatpush2.msra.mxu0 0.0
    %218 = vmatprep.subr.mxu0 0.0
    %219 = vmatpush2.msra.mxu0 0.0
    %220 = vmatprep.subr.mxu0 0.0
    %221 = vmatpush2.msra.mxu0 0.0
    %222 = vmatprep.subr.mxu0 0.0
    %223 = vmatpush2.msra.mxu0 0.0
    %224 = vmatprep.subr.mxu0 0.0
    %225 = vmatpush2.msra.mxu0 0.0
    %226 = vmatprep.subr.mxu0 0.0
    %227 = vmatpush2.msra.mxu0 0.0
    %228 = vmatprep.subr.mxu0 0.0
    %229 = vmatpush2.msra.mxu0 0.0
    %230 = vmatprep.subr.mxu0 0.0
    %231 = vmatpush2.msra.mxu0 0.0
    %232 = vmatprep.subr.mxu0 0.0
    %233 = vmatpush2.msra.mxu0 0.0
    %234 = vmatprep.subr.mxu0 0.0
    %235 = vmatpush2.msra.mxu0 0.0
    %236 = vmatprep.subr.mxu0 0.0
    %237 = vmatpush2.msra.mxu0 0.0
    %238 = vmatprep.subr.mxu0 0.0
    %239 = vmatpush2.msra.mxu0 0.0
    %240 = vmatprep.mubr.f32.mxu0 0.0
    %241 = vmatmul.mubr.f32.gmra.mxu0 %v174
    %v242 = vpop.f32.mrf.mxu0
    %v243 = vadd.f32 %v170, %v242
    %v244 = vpop.f32.mrf.mxu0
    %245 = vdwg.mxu0
    %v246 = vmax.f32 %v243, 0.0
    %v247 = vld [vmem:[%s5] sm:$0xff]
    %v248 = vld [vmem:[%s5 + $0x8] sm:$0xff]
    %v249 = vld [vmem:[%s5 + $0x10] sm:$0xff]
    %v250 = vld [vmem:[%s5 + $0x18] sm:$0xff]
    %v251 = vld [vmem:[%s6] sm:$0x1]
    %v253 = vlaneseq
    %v254 = vshrl.u32 %v253, 7
    %v255 = vsub.s32 0, %v254
    %v256 = vrot.slane %v251, %v255
    %v259 = vsel %vm172, %v246, 0
    %261 = vmatprep.subr.mxu0 0.0
    %262 = vmatpush1.msra.mxu0 0.0
    %263 = vmatprep.subr.mxu0 0.0
    %264 = vmatpush1.msra.mxu0 0.0
    %265 = vmatprep.subr.mxu0 0.0
    %266 = vmatpush1.msra.mxu0 0.0
    %267 = vmatprep.subr.mxu0 0.0
    %268 = vmatpush1.msra.mxu0 0.0
    %269 = vmatprep.subr.mxu0 0.0
    %270 = vmatpush1.msra.mxu0 0.0
    %271 = vmatprep.subr.mxu0 0.0
    %272 = vmatpush1.msra.mxu0 0.0
    %273 = vmatprep.subr.mxu0 0.0
    %274 = vmatpush1.msra.mxu0 0.0
    %275 = vmatprep.subr.mxu0 0.0
    %276 = vmatpush1.msra.mxu0 0.0
    %277 = vmatprep.subr.mxu0 0.0
    %278 = vmatpush1.msra.mxu0 0.0
    %279 = vmatprep.subr.mxu0 0.0
    %280 = vmatpush1.msra.mxu0 0.0
    %281 = vmatprep.subr.mxu0 0.0
    %282 = vmatpush1.msra.mxu0 0.0
    %283 = vmatprep.subr.mxu0 0.0
    %284 = vmatpush1.msra.mxu0 0.0
    %285 = vmatprep.subr.mxu0 0.0
    %286 = vmatpush1.msra.mxu0 %v250
    %287 = vmatprep.subr.mxu0 0.0
    %288 = vmatpush1.msra.mxu0 %v249
    %289 = vmatprep.subr.mxu0 0.0
    %290 = vmatpush1.msra.mxu0 %v248
    %291 = vmatprep.subr.mxu0 0.0
    %292 = vmatpush1.msra.mxu0 %v247
    %293 = vmatprep.subr.mxu0 0.0
    %294 = vmatpush2.msra.mxu0 0.0
    %295 = vmatprep.subr.mxu0 0.0
    %296 = vmatpush2.msra.mxu0 0.0
    %297 = vmatprep.subr.mxu0 0.0
    %298 = vmatpush2.msra.mxu0 0.0
    %299 = vmatprep.subr.mxu0 0.0
    %300 = vmatpush2.msra.mxu0 0.0
    %301 = vmatprep.subr.mxu0 0.0
    %302 = vmatpush2.msra.mxu0 0.0
    %303 = vmatprep.subr.mxu0 0.0
    %304 = vmatpush2.msra.mxu0 0.0
    %305 = vmatprep.subr.mxu0 0.0
    %306 = vmatpush2.msra.mxu0 0.0
    %307 = vmatprep.subr.mxu0 0.0
    %308 = vmatpush2.msra.mxu0 0.0
    %309 = vmatprep.subr.mxu0 0.0
    %310 = vmatpush2.msra.mxu0 0.0
    %311 = vmatprep.subr.mxu0 0.0
    %312 = vmatpush2.msra.mxu0 0.0
    %313 = vmatprep.subr.mxu0 0.0
    %314 = vmatpush2.msra.mxu0 0.0
    %315 = vmatprep.subr.mxu0 0.0
    %316 = vmatpush2.msra.mxu0 0.0
    %317 = vmatprep.subr.mxu0 0.0
    %318 = vmatpush2.msra.mxu0 0.0
    %319 = vmatprep.subr.mxu0 0.0
    %320 = vmatpush2.msra.mxu0 0.0
    %321 = vmatprep.subr.mxu0 0.0
    %322 = vmatpush2.msra.mxu0 0.0
    %323 = vmatprep.subr.mxu0 0.0
    %324 = vmatpush2.msra.mxu0 0.0
    %325 = vmatprep.mubr.f32.mxu0 0.0
    %326 = vmatmul.mubr.f32.gmra.mxu0 %v259
    %v327 = vpop.f32.mrf.mxu0
    %v328 = vadd.f32 %v256, %v327
    %v329 = vpop.f32.mrf.mxu0
    %330 = vdwg.mxu0
    %v331 = vmax.f32 %v328, 0.0
    %v332 = vadd.f32 %v159, %v331
    %333 = vst [vmem:[%s7] sm:$0xff] %v332
    // Predicated region
    $region42: #{_mlp2path_forward_impl.1} parent=1 // pred_check
      _
    $region43: #{_mlp2path_forward_impl.1} parent=1 // pred_check_branch
      %335 = sbr.rel (0) target = $region45
    $region44: #{_mlp2path_forward_impl.1} parent=1 // pred_region
      _
    $region45: #{_mlp2path_forward_impl.1} parent=1 // pred_fallthru
      _
    // Predicated region
    $region46: #{_mlp2path_forward_impl.1} parent=1 // pred_check
      _
    $region47: #{_mlp2path_forward_impl.1} parent=1 // pred_check_branch
      %337 = sbr.rel (0) target = $region49
    $region48: #{_mlp2path_forward_impl.1} parent=1 // pred_region
      _
    $region49: #{_mlp2path_forward_impl.1} parent=1 // pred_fallthru
      _
    %338 = vsyncpa [#allocation3], 1
    %339 = vsyncpa [#allocation5], 1

</llo_original>
